<compile_context>
chip_gen: v7x
topology: tpu7x:2x2x1
jax: 0.10.0
libtpu: 0.0.40
codegen_flags: <defaults>
</compile_context>

<pallas_src>
import jax
import jax.numpy as jnp
from jax.experimental import pallas as pl
from jax.experimental.pallas import tpu as pltpu


def _round_up(v, m):
    return ((v + m - 1) // m) * m


def _sublane(dtype):
    # Sub-32-bit dtypes pack along sublanes: f32 -> 8, bf16 -> 16, int8 -> 32.
    return max(8, 32 // jnp.dtype(dtype).itemsize)


def _pick_tile_aligned(dim_aligned, tile_max, align):
    """dim_aligned is a multiple of `align`; return the largest `align`-multiple
    tile <= tile_max that divides it (always exists, worst case `align`)."""
    if dim_aligned <= tile_max:
        return dim_aligned
    t = max(align, (tile_max // align) * align)
    while dim_aligned % t:
        t -= align
    return t


def _linear_kernel(x_ref, w_ref, b_ref, o_ref):
    """One (tm, tn) output tile; grid = (M, N, K) with the K reduction last.

    o_ref's index_map ignores k, so the f32 output tile stays resident in VMEM
    across the whole K loop and doubles as the accumulator (no scratch, no
    finalize copy). Operands go to the MXU in their native dtype with f32
    accumulation; bias is folded into the first K step (added exactly once).
    """
    k = pl.program_id(2)
    partial = jnp.dot(x_ref[...], w_ref[...], preferred_element_type=jnp.float32)

    @pl.when(k == 0)
    def _init():
        o_ref[...] = partial + b_ref[...].astype(jnp.float32)

    @pl.when(k != 0)
    def _accumulate():
        o_ref[...] = o_ref[...] + partial


def prepare_params(weight, bias):
    """Pad Linear params ONCE (at parameter-creation time) to 128-aligned K and
    N so the per-forward wrapper never re-pads W (which would add a full extra
    HBM pass over the dominant streamed operand)."""
    K, N = weight.shape
    k_al, n_al = _round_up(K, 128), _round_up(N, 128)
    w = jnp.pad(weight, ((0, k_al - K), (0, n_al - N)))
    b = jnp.pad(bias, ((0, 0), (0, n_al - N)))
    return w, b, N


def linear_module(x, weight, bias, *, out_dim=None,
                  tm_max=256, tn_max=256, tk_max=None):
    """Pallas equivalent of LinearModule.forward: wider_linear(X.float()).

    x:      [B, wide_dim]                       (f32 / bf16 / int8)
    weight: [wide_dim(_padded), out_dim(_padded)]  (ideally from prepare_params)
    bias:   [1, out_dim(_padded)]
    returns [B, out_dim] float32
    """
    B, K = x.shape
    Kw, Nw = weight.shape
    assert Kw >= K, "weight rows must cover x's feature dim"
    assert bias.shape == (1, Nw)
    if out_dim is None:
        out_dim = Nw
    assert out_dim <= Nw

    bx = jnp.dtype(x.dtype).itemsize
    bw = jnp.dtype(weight.dtype).itemsize
    bb = jnp.dtype(bias.dtype).itemsize

    if tk_max is None:
        # Mem-bound matvec-like shapes: large K tiles amortize per-grid-step
        # overhead; narrow dtypes halve the tile bytes, so go deeper.
        tk_max = 1024 if bx >= 4 else 2048

    # ---- Aligned extents (K and N are lane dims somewhere -> 128) ----------
    k_pad = _round_up(Kw, 128)
    n_pad = _round_up(Nw, 128)

    # ---- Fallback padding of params (prefer prepare_params: done once) -----
    if (Kw, Nw) != (k_pad, n_pad):
        weight = jnp.pad(weight, ((0, k_pad - Kw), (0, n_pad - Nw)))
    if Nw != n_pad:
        bias = jnp.pad(bias, ((0, 0), (0, n_pad - Nw)))

    # ---- M tiling: full-dim block when it fits (no pad), else dtype-aware ---
    m_sub = _sublane(x.dtype)
    if B <= tm_max:
        tm, m_pad = B, B
    else:
        m_pad = _round_up(B, m_sub)
        tm = max(m_sub, (min(tm_max, m_pad) // m_sub) * m_sub)
        while m_pad % tm:
            tm -= m_sub

    tk = _pick_tile_aligned(k_pad, tk_max, 128)
    tn = _pick_tile_aligned(n_pad, max(tn_max, 128), 128)

    # x only needs padding when K isn't 128-aligned or B got sublane-rounded.
    if (B, K) != (m_pad, k_pad):
        x = jnp.pad(x, ((0, m_pad - B), (0, k_pad - K)))

    gm, gn, gk = m_pad // tm, n_pad // tn, k_pad // tk

    # Deeper buffering on the streamed weight operand only when there is a real
    # K loop (hides DMA bubbles at K-step boundaries when HBM-bound).
    if gk > 1:
        w_spec = pl.BlockSpec((tk, tn), lambda i, j, k: (k, j),
                              pipeline_mode=pl.Buffered(3))
    else:
        w_spec = pl.BlockSpec((tk, tn), lambda i, j, k: (k, j))

    # ---- VMEM budget (no scratch; native-dtype input tiles; f32 output) ----
    n_wbuf = 3 if gk > 1 else 2
    vmem_need = (2 * tm * tk * bx + n_wbuf * tk * tn * bw
                 + 2 * tn * bb + 2 * tm * tn * 4)
    vmem_limit = int(min(40 * 1024 * 1024, max(2 * vmem_need, 8 * 1024 * 1024)))

    cost = pl.CostEstimate(
        flops=2 * m_pad * n_pad * k_pad,
        transcendentals=0,
        # Include operand revisits: X re-read once per N block, W once per M block.
        bytes_accessed=(gn * m_pad * k_pad * bx + gm * k_pad * n_pad * bw
                        + gm * gk * n_pad * bb + m_pad * n_pad * 4),
    )

    out_pad = pl.pallas_call(
        _linear_kernel,
        out_shape=jax.ShapeDtypeStruct((m_pad, n_pad), jnp.float32),
        grid_spec=pltpu.PrefetchScalarGridSpec(
            num_scalar_prefetch=0,
            grid=(gm, gn, gk),
            in_specs=[
                pl.BlockSpec((tm, tk), lambda i, j, k: (i, k)),
                w_spec,
                pl.BlockSpec((1, tn), lambda i, j, k: (0, j)),
            ],
            out_specs=pl.BlockSpec((tm, tn), lambda i, j, k: (i, j)),
        ),
        compiler_params=pltpu.CompilerParams(
            dimension_semantics=("parallel", "parallel", "arbitrary"),
            vmem_limit_bytes=vmem_limit,
        ),
        cost_estimate=cost,
    )(x, weight, bias)

    if (m_pad, n_pad) != (B, out_dim):
        out_pad = out_pad[:B, :out_dim]
    return out_pad


if __name__ == "__main__":
    # Shapes implied by the module: X: [batch, wide_dim], Linear(wide_dim, 1).
    batch, wide_dim, output_dim = 8, 32, 1
    key = jax.random.PRNGKey(0)
    kx, kw, kb = jax.random.split(key, 3)

    x = jax.random.normal(kx, (batch, wide_dim), dtype=jnp.float32)
    bound = 1.0 / (wide_dim ** 0.5)
    # torch weight is [output_dim, wide_dim]; we store its transpose.
    w_torch_layout = jax.random.uniform(
        kw, (output_dim, wide_dim), minval=-bound, maxval=bound, dtype=jnp.float32)
    weight = w_torch_layout.T                      # [wide_dim, output_dim]
    bias = jax.random.uniform(
        kb, (1, output_dim), minval=-bound, maxval=bound, dtype=jnp.float32)

    # Production path: pad params once, never inside the forward.
    w_p, b_p, n_out = prepare_params(weight, bias)
    out = jax.block_until_ready(linear_module(x, w_p, b_p, out_dim=n_out))
    ref = x @ weight + bias
    assert out.shape == (batch, output_dim)
    assert jnp.allclose(out, ref, atol=1e-5, rtol=1e-5)

    # Check 2: native bf16 inputs straight to the MXU, multi-M-block grid,
    # no per-call padding of x or W.
    k2x, k2w, k2b = jax.random.split(jax.random.PRNGKey(1), 3)
    B2, K2, N2 = 384, 640, 3
    x2 = jax.random.normal(k2x, (B2, K2), dtype=jnp.bfloat16)
    w2 = (jax.random.normal(k2w, (K2, N2), dtype=jnp.bfloat16) * 0.05
          ).astype(jnp.bfloat16)
    b2 = jax.random.normal(k2b, (1, N2), dtype=jnp.float32) * 0.05
    ref2 = x2.astype(jnp.float32) @ w2.astype(jnp.float32) + b2

    w2_p, b2_p, n2_out = prepare_params(w2, b2)
    out2 = jax.block_until_ready(linear_module(x2, w2_p, b2_p, out_dim=n2_out))
    assert out2.shape == (B2, N2)
    assert jnp.allclose(out2, ref2, atol=2e-2, rtol=2e-2)

    # Check 3: force a multi-K-step grid (direct accumulation into the resident
    # output block + Buffered(3) weight stream) and the raw-param fallback path.
    out3 = jax.block_until_ready(
        linear_module(x2, w2, b2, tm_max=128, tk_max=256))
    assert out3.shape == (B2, N2)
    assert jnp.allclose(out3, ref2, atol=2e-2, rtol=2e-2)

    print("KERNEL_OK")
</pallas_src>

<mosaic_0001>
module attributes {stable_mosaic.version = 11 : i64} {
  func.func @_linear_kernel(%arg0: i32, %arg1: i32, %arg2: i32, %arg3: memref<8x128xf32, #tpu.memory_space<vmem>>, %arg4: memref<128x128xf32, #tpu.memory_space<vmem>>, %arg5: memref<1x128xf32, #tpu.memory_space<vmem>>, %arg6: memref<8x128xf32, #tpu.memory_space<vmem>>) attributes {dimension_semantics = [#tpu.dimension_semantics<parallel>, #tpu.dimension_semantics<parallel>, #tpu.dimension_semantics<arbitrary>], iteration_bounds = array<i64: 1, 1, 1>, scalar_prefetch = 0 : i64, scratch_operands = 0 : i64, tpu.core_type = #tpu.core_type<tc>, window_params = [{transform_indices = @transform_0, window_bounds = array<i64: 8, 128>}, {transform_indices = @transform_1, window_bounds = array<i64: 128, 128>}, {transform_indices = @transform_2, window_bounds = array<i64: 1, 128>}, {transform_indices = @transform_3, window_bounds = array<i64: 8, 128>}]} {
    %c0 = arith.constant 0 : index
    %c0_0 = arith.constant 0 : index
    %0 = vector.load %arg3[%c0, %c0_0] : memref<8x128xf32, #tpu.memory_space<vmem>>, vector<8x128xf32>
    %c0_1 = arith.constant 0 : index
    %c0_2 = arith.constant 0 : index
    %1 = vector.load %arg4[%c0_1, %c0_2] : memref<128x128xf32, #tpu.memory_space<vmem>>, vector<128x128xf32>
    %cst = arith.constant dense<0.000000e+00> : vector<8x128xf32>
    %2 = tpu.matmul %0, %1, %cst {dimension_numbers = #tpu.dot_dimension_numbers<[1], [0], [0], [1], [0, 0, 1, 1], [], []>} : vector<8x128xf32>, vector<128x128xf32>, vector<8x128xf32> -> vector<8x128xf32>
    %c0_i32 = arith.constant 0 : i32
    %3 = arith.cmpi eq, %arg2, %c0_i32 : i32
    %4 = arith.extui %3 : i1 to i32
    %c0_i32_3 = arith.constant 0 : i32
    %5 = arith.cmpi ne, %4, %c0_i32_3 : i32
    scf.if %5 {
      %c0_6 = arith.constant 0 : index
      %c0_7 = arith.constant 0 : index
      %9 = vector.load %arg5[%c0_6, %c0_7] : memref<1x128xf32, #tpu.memory_space<vmem>>, vector<1x128xf32>
      %10 = vector.broadcast %9 : vector<1x128xf32> to vector<8x128xf32>
      %11 = arith.addf %2, %10 : vector<8x128xf32>
      %c0_8 = arith.constant 0 : index
      %c0_9 = arith.constant 0 : index
      %12 = vector.load %arg6[%c0_8, %c0_9] : memref<8x128xf32, #tpu.memory_space<vmem>>, vector<8x128xf32>
      tpu.vector_store %arg6[%c0_8, %c0_9], %11 {strides = array<i32>} : memref<8x128xf32, #tpu.memory_space<vmem>>, vector<8x128xf32>,
    } else {
    }
    %c0_i32_4 = arith.constant 0 : i32
    %6 = arith.cmpi ne, %arg2, %c0_i32_4 : i32
    %7 = arith.extui %6 : i1 to i32
    %c0_i32_5 = arith.constant 0 : i32
    %8 = arith.cmpi ne, %7, %c0_i32_5 : i32
    scf.if %8 {
      %c0_6 = arith.constant 0 : index
      %c0_7 = arith.constant 0 : index
      %9 = vector.load %arg6[%c0_6, %c0_7] : memref<8x128xf32, #tpu.memory_space<vmem>>, vector<8x128xf32>
      %10 = arith.addf %9, %2 : vector<8x128xf32>
      %c0_8 = arith.constant 0 : index
      %c0_9 = arith.constant 0 : index
      %11 = vector.load %arg6[%c0_8, %c0_9] : memref<8x128xf32, #tpu.memory_space<vmem>>, vector<8x128xf32>
      tpu.vector_store %arg6[%c0_8, %c0_9], %10 {strides = array<i32>} : memref<8x128xf32, #tpu.memory_space<vmem>>, vector<8x128xf32>,
    } else {
    }
    return
  }
  func.func @transform_0(%arg0: i32, %arg1: i32, %arg2: i32) -> (i32, i32) {
    %c0_i32 = arith.constant 0 : i32
    return %arg0, %arg2 : i32, i32
  }
  func.func @transform_1(%arg0: i32, %arg1: i32, %arg2: i32) -> (i32, i32) {
    %c0_i32 = arith.constant 0 : i32
    return %arg2, %arg1 : i32, i32
  }
  func.func @transform_2(%arg0: i32, %arg1: i32, %arg2: i32) -> (i32, i32) {
    %c0_i32 = arith.constant 0 : i32
    %c0_i32_0 = arith.constant 0 : i32
    return %c0_i32, %arg1 : i32, i32
  }
  func.func @transform_3(%arg0: i32, %arg1: i32, %arg2: i32) -> (i32, i32) {
    %c0_i32 = arith.constant 0 : i32
    return %arg0, %arg1 : i32, i32
  }
}

</mosaic_0001>

<llo_original>
// kernel: tpu_custom_call.1
$region0: #{tpu_custom_call.1}
  #allocation0 [shape = 'u32[]', space=smem, size = 0x4, offset = 0x4, fixed_abs, tag = 'smem constant byte address 0x4 - core index']
  #allocation1 [shape = 'u32[144,128]{1,0:T(1,128)}', space=vmem, size = 0x12000, scoped, tag = 'internal scratch']
  %s0 = inlined_call_operand.hbm [shape: f32[8,128], index: 0, kind: input, shape index: {}]
  %s1 = inlined_call_operand.hbm [shape: f32[128,128], index: 1, kind: input, shape index: {}]
  %s2 = inlined_call_operand.vmem [shape: f32[1,128], index: 2, kind: input, shape index: {}]
  %s3 = inlined_call_operand.hbm [shape: f32[8,128], index: 3, kind: output, shape index: {}]
  %s4 = sld [smem:[#allocation0]]
  $region38: #{tpu_custom_call.1} parent=0
    _
  %s6 = ssub.s32 1, %s4
  %s7 = scalar_select 0, %s6, %s4
  $region1: #{tpu_custom_call.1} parent=0
    #allocation2 [shape = 'u8[4096]{0}', space=vmem, size = 0x1000, scoped, tag = 'input window, operand 0, single buffered']
    #allocation3 [shape = 's32[1]{0}', space=sflag, size = 0x4, scoped, tag = 'scoped memory for tpu_custom_call.1']
    #allocation4 [shape = 's32[1]{0}', space=sflag, size = 0x4, scoped, tag = 'scoped memory for tpu_custom_call.1']
    #allocation5 [shape = 'u8[65536]{0}', space=vmem, size = 0x10000, scoped, tag = 'input window, operand 1, single buffered']
    #allocation6 [shape = 's32[1]{0}', space=sflag, size = 0x4, scoped, tag = 'scoped memory for tpu_custom_call.1']
    #allocation7 [shape = 'u8[4096]{0}', space=vmem, size = 0x1000, scoped, tag = 'output window, operand 0, single buffered']
    %8 = vsyncpa [#allocation3], 0
    %9 = vsyncpa [#allocation6], 0
    %10 = vsyncpa [#allocation4], 0
    // Predicated region
    $region2: #{tpu_custom_call.1} parent=1 // pred_check
      _
    $region3: #{tpu_custom_call.1} parent=1 // pred_check_branch
      %12 = sbr.rel (0) target = $region5
    $region4: #{tpu_custom_call.1} parent=1 // pred_region
      %s14 = ssub.s32 128, 128
      %15 = vsyncadd [#allocation3], %s14
      %s17 = sshll.u32 [#allocation2], 4
      %s18 = int_to_ptr.vmem [resolvable:$true] %s17
      %20 = dma.hbm_to_vmem [thread:$0]  %s0, 128, %s18, [#allocation3]
    $region5: #{tpu_custom_call.1} parent=1 // pred_fallthru
      _
    // Predicated region
    $region6: #{tpu_custom_call.1} parent=1 // pred_check
      _
    $region7: #{tpu_custom_call.1} parent=1 // pred_check_branch
      %22 = sbr.rel (0) target = $region9
    $region8: #{tpu_custom_call.1} parent=1 // pred_region
      %s24 = ssub.s32 2048, 2048
      %25 = vsyncadd [#allocation6], %s24
      %s26 = sshll.u32 [#allocation5], 4
      %s27 = int_to_ptr.vmem [resolvable:$true] %s26
      %32 = dma.hbm_to_vmem [thread:$0]  %s1, 2048, %s27, [#allocation6], 128, 128, 8
    $region9: #{tpu_custom_call.1} parent=1 // pred_fallthru
      _
    // Predicated region
    $region10: #{tpu_custom_call.1} parent=1 // pred_check
      _
    $region11: #{tpu_custom_call.1} parent=1 // pred_check_branch
      %34 = sbr.rel (0) target = $region13
    $region12: #{tpu_custom_call.1} parent=1 // pred_region
      _
    $region13: #{tpu_custom_call.1} parent=1 // pred_fallthru
      _
    // Predicated region
    $region14: #{tpu_custom_call.1} parent=1 // pred_check
      _
    $region15: #{tpu_custom_call.1} parent=1 // pred_check_branch
      %36 = sbr.rel (0) target = $region17
    $region16: #{tpu_custom_call.1} parent=1 // pred_region
      %37 = dma.done [#allocation3], 128
    $region17: #{tpu_custom_call.1} parent=1 // pred_fallthru
      _
    // Predicated region
    $region18: #{tpu_custom_call.1} parent=1 // pred_check
      _
    $region19: #{tpu_custom_call.1} parent=1 // pred_check_branch
      %39 = sbr.rel (0) target = $region21
    $region20: #{tpu_custom_call.1} parent=1 // pred_region
      %40 = dma.done [#allocation6], 2048
    $region21: #{tpu_custom_call.1} parent=1 // pred_fallthru
      _
    %v41 = vld [vmem:[#allocation2] sm:$0xff]
    %v42 = vld [vmem:[#allocation5] sm:$0xff]
    %v43 = vld [vmem:[#allocation5 + $0x8] sm:$0xff]
    %v44 = vld [vmem:[#allocation5 + $0x10] sm:$0xff]
    %v45 = vld [vmem:[#allocation5 + $0x18] sm:$0xff]
    %v46 = vld [vmem:[#allocation5 + $0x20] sm:$0xff]
    %v47 = vld [vmem:[#allocation5 + $0x28] sm:$0xff]
    %v48 = vld [vmem:[#allocation5 + $0x30] sm:$0xff]
    %v49 = vld [vmem:[#allocation5 + $0x38] sm:$0xff]
    %v50 = vld [vmem:[#allocation5 + $0x40] sm:$0xff]
    %v51 = vld [vmem:[#allocation5 + $0x48] sm:$0xff]
    %v52 = vld [vmem:[#allocation5 + $0x50] sm:$0xff]
    %v53 = vld [vmem:[#allocation5 + $0x58] sm:$0xff]
    %v54 = vld [vmem:[#allocation5 + $0x60] sm:$0xff]
    %v55 = vld [vmem:[#allocation5 + $0x68] sm:$0xff]
    %v56 = vld [vmem:[#allocation5 + $0x70] sm:$0xff]
    %v57 = vld [vmem:[#allocation5 + $0x78] sm:$0xff]
    %58 = vmatprep.subr.mxu0 0.0
    %59 = vmatpush1.msra.mxu0 %v42
    %60 = vmatprep.subr.mxu0 0.0
    %61 = vmatpush1.msra.mxu0 %v43
    %62 = vmatprep.subr.mxu0 0.0
    %63 = vmatpush1.msra.mxu0 %v44
    %64 = vmatprep.subr.mxu0 0.0
    %65 = vmatpush1.msra.mxu0 %v45
    %66 = vmatprep.subr.mxu0 0.0
    %67 = vmatpush1.msra.mxu0 %v46
    %68 = vmatprep.subr.mxu0 0.0
    %69 = vmatpush1.msra.mxu0 %v47
    %70 = vmatprep.subr.mxu0 0.0
    %71 = vmatpush1.msra.mxu0 %v48
    %72 = vmatprep.subr.mxu0 0.0
    %73 = vmatpush1.msra.mxu0 %v49
    %74 = vmatprep.subr.mxu0 0.0
    %75 = vmatpush1.msra.mxu0 %v50
    %76 = vmatprep.subr.mxu0 0.0
    %77 = vmatpush1.msra.mxu0 %v51
    %78 = vmatprep.subr.mxu0 0.0
    %79 = vmatpush1.msra.mxu0 %v52
    %80 = vmatprep.subr.mxu0 0.0
    %81 = vmatpush1.msra.mxu0 %v53
    %82 = vmatprep.subr.mxu0 0.0
    %83 = vmatpush1.msra.mxu0 %v54
    %84 = vmatprep.subr.mxu0 0.0
    %85 = vmatpush1.msra.mxu0 %v55
    %86 = vmatprep.subr.mxu0 0.0
    %87 = vmatpush1.msra.mxu0 %v56
    %88 = vmatprep.subr.mxu0 0.0
    %89 = vmatpush1.msra.mxu0 %v57
    %90 = vmatprep.subr.mxu0 0.0
    %91 = vmatpush1.msra.mxu0 0.0
    %92 = vmatprep.subr.mxu0 0.0
    %93 = vmatpush1.msra.mxu0 0.0
    %94 = vmatprep.subr.mxu0 0.0
    %95 = vmatpush1.msra.mxu0 0.0
    %96 = vmatprep.subr.mxu0 0.0
    %97 = vmatpush1.msra.mxu0 0.0
    %98 = vmatprep.subr.mxu0 0.0
    %99 = vmatpush1.msra.mxu0 0.0
    %100 = vmatprep.subr.mxu0 0.0
    %101 = vmatpush1.msra.mxu0 0.0
    %102 = vmatprep.subr.mxu0 0.0
    %103 = vmatpush1.msra.mxu0 0.0
    %104 = vmatprep.subr.mxu0 0.0
    %105 = vmatpush1.msra.mxu0 0.0
    %106 = vmatprep.subr.mxu0 0.0
    %107 = vmatpush1.msra.mxu0 0.0
    %108 = vmatprep.subr.mxu0 0.0
    %109 = vmatpush1.msra.mxu0 0.0
    %110 = vmatprep.subr.mxu0 0.0
    %111 = vmatpush1.msra.mxu0 0.0
    %112 = vmatprep.subr.mxu0 0.0
    %113 = vmatpush1.msra.mxu0 0.0
    %114 = vmatprep.subr.mxu0 0.0
    %115 = vmatpush1.msra.mxu0 0.0
    %116 = vmatprep.subr.mxu0 0.0
    %117 = vmatpush1.msra.mxu0 0.0
    %118 = vmatprep.subr.mxu0 0.0
    %119 = vmatpush1.msra.mxu0 0.0
    %120 = vmatprep.subr.mxu0 0.0
    %121 = vmatpush1.msra.mxu0 0.0
    %122 = vmatprep.mubr.f32.mxu0 0.0
    %123 = vmatmul.mubr.f32.gmra.mrb[0].mxu0 %v41
    %v124 = vpop.f32.mrb[0].mxu0
    %v125 = vadd.f32 0.0, %v124
    %v126 = vpop.f32.mrb[0].mxu0
    %127 = vdwg.mxu0
    %p128 = scmp.eq.s32.totalorder 0, 0
    // Predicated region
    $region22: #{tpu_custom_call.1} parent=1 // pred_check
      %p129 = pneg %p128
    $region23: #{tpu_custom_call.1} parent=1 // pred_check_branch
      %131 = sbr.rel (%p129) target = $region25
    $region24: #{tpu_custom_call.1} parent=1 // pred_region
      %v132 = vld [vmem:[%s2] sm:$0x1]
      %v134 = vlaneseq
      %v135 = vshrl.u32 %v134, 7
      %v136 = vsub.s32 0, %v135
      %v137 = vrot.slane %v132, %v136
      %v139 = vadd.f32 %v125, %v137
      %140 = vst [vmem:[#allocation7] sm:$0xff] %v139
    $region25: #{tpu_custom_call.1} parent=1 // pred_fallthru
      _
    %p141 = scmp.ne.s32.totalorder 0, 0
    // Predicated region
    $region26: #{tpu_custom_call.1} parent=1 // pred_check
      %p142 = pneg %p141
    $region27: #{tpu_custom_call.1} parent=1 // pred_check_branch
      %144 = sbr.rel (%p142) target = $region29
    $region28: #{tpu_custom_call.1} parent=1 // pred_region
      %v145 = vld [vmem:[#allocation7] sm:$0xff]
      %v146 = vadd.f32 %v145, %v125
      %147 = vst [vmem:[#allocation7] sm:$0xff] %v146
    $region29: #{tpu_custom_call.1} parent=1 // pred_fallthru
      _
    // Predicated region
    $region30: #{tpu_custom_call.1} parent=1 // pred_check
      _
    $region31: #{tpu_custom_call.1} parent=1 // pred_check_branch
      %149 = sbr.rel (0) target = $region33
    $region32: #{tpu_custom_call.1} parent=1 // pred_region
      %s151 = ssub.s32 128, 128
      %152 = vsyncadd [#allocation4], %s151
      %s154 = sshll.u32 [#allocation7], 4
      %s155 = int_to_ptr.vmem [resolvable:$true] %s154
      %157 = dma.vmem_to_hbm [thread:$0]  %s155, 128, %s3, [#allocation4]
    $region33: #{tpu_custom_call.1} parent=1 // pred_fallthru
      _
    // Predicated region
    $region34: #{tpu_custom_call.1} parent=1 // pred_check
      _
    $region35: #{tpu_custom_call.1} parent=1 // pred_check_branch
      %159 = sbr.rel (0) target = $region37
    $region36: #{tpu_custom_call.1} parent=1 // pred_region
      %160 = dma.done [#allocation4], 128
    $region37: #{tpu_custom_call.1} parent=1 // pred_fallthru
      _
    %161 = vsyncpa [#allocation3], 1
    %162 = vsyncpa [#allocation6], 1
    %163 = vsyncpa [#allocation4], 1

</llo_original>
